<compile_context>
chip_gen: v7x
topology: tpu7x:2x2x1
jax: 0.10.0
libtpu: 0.0.40
codegen_flags: <defaults>
</compile_context>

<pallas_src>
import math

import jax
import jax.numpy as jnp
from jax.experimental import pallas as pl
from jax.experimental.pallas import tpu as pltpu

GAMMA = 1.25
BETA = 0.1

_LANES = 1024   # lane width of the flattened slab (multiple of 128)
_TR = 1024      # rows per block -> 4 MiB f32 tiles


def _f(x):
    """The concrete transform wrapped by ProbTransform (elementwise)."""
    return jnp.clip(x.astype(jnp.float32) * GAMMA + BETA, 0.0, 1.0)


def _transform_kernel(x_ref, o_ref):
    o_ref[...] = _f(x_ref[...]).astype(o_ref.dtype)


def _choose_tile_rows(rows):
    """Pick a row tile that is a multiple of 8 (or the full row count)."""
    if rows >= _TR:
        return _TR
    if rows >= 16 and rows % 8 == 0:
        # Split small-but-not-tiny inputs into >=2 blocks so both v7x
        # TensorCores get work on the "parallel" row axis.
        half = (rows + 1) // 2
        return ((half + 7) // 8) * 8
    return rows


def _run_transform_2d(x2):
    """Pallas elementwise pass over a lane-dense (rows, lanes) slab."""
    rows, lanes = x2.shape
    tr = _choose_tile_rows(rows)
    grid = (pl.cdiv(rows, tr),)
    return pl.pallas_call(
        _transform_kernel,
        out_shape=jax.ShapeDtypeStruct((rows, lanes), x2.dtype),
        grid_spec=pltpu.PrefetchScalarGridSpec(
            num_scalar_prefetch=0,
            grid=grid,
            in_specs=[pl.BlockSpec((tr, lanes), lambda i: (i, 0))],
            out_specs=pl.BlockSpec((tr, lanes), lambda i: (i, 0)),
        ),
        compiler_params=pltpu.CompilerParams(
            dimension_semantics=("parallel",),
            vmem_limit_bytes=32 << 20,
        ),
        input_output_aliases={0: 0},
    )(x2)


@jax.jit
def _prob_transform_jit(x, p, seed):
    orig_shape = x.shape
    dtype = x.dtype
    total = math.prod(orig_shape)

    lanes = _LANES if total >= _LANES else 128
    bulk = (total // lanes) * lanes          # lane-divisible prefix handled by the kernel

    def _apply(xx):
        xf = xx.reshape(-1)
        if bulk == 0:
            # Tiny input: no lane-dense slab; plain jnp (fused by XLA).
            return _f(xf).astype(dtype).reshape(orig_shape)
        rows = bulk // lanes
        x2 = (xf if bulk == total else xf[:bulk]).reshape(rows, lanes)
        y_bulk = _run_transform_2d(x2).reshape(-1)
        if bulk == total:
            return y_bulk.reshape(orig_shape)
        # Sub-lane tail (< lanes elements): handled outside the kernel.
        y_tail = _f(xf[bulk:]).astype(dtype)
        return jnp.concatenate([y_bulk, y_tail]).reshape(orig_shape)

    # One Bernoulli draw per forward call (mirrors `random.random() < self.p`).
    u = jax.random.uniform(jax.random.PRNGKey(seed), (), dtype=jnp.float32)
    take = u < p.astype(jnp.float32)

    # Identity branch skips the pallas_call entirely -> no HBM traffic for it.
    return jax.lax.cond(take, _apply, lambda xx: xx, x)


def prob_transform(x, p=1.0, seed=0):
    """Apply f(x) with probability p (decided once per call from `seed`), else return x."""
    return _prob_transform_jit(x, jnp.float32(p), jnp.uint32(seed))


if __name__ == "__main__":
    key = jax.random.PRNGKey(0)
    x = jax.random.uniform(key, (2, 4, 16, 16), dtype=jnp.float32)

    # p = 1.0 -> transform is always applied (default ProbTransform(f, p=1)).
    out_p1 = jax.block_until_ready(prob_transform(x, p=1.0, seed=0))
    ref_p1 = jnp.clip(x * GAMMA + BETA, 0.0, 1.0)
    assert out_p1.shape == x.shape and out_p1.dtype == x.dtype
    assert jnp.allclose(out_p1, ref_p1, atol=1e-6), "p=1 branch mismatch"

    # p = 0.0 -> identity path (kernel is skipped entirely by lax.cond).
    out_p0 = jax.block_until_ready(prob_transform(x, p=0.0, seed=0))
    assert jnp.allclose(out_p0, x, atol=1e-6), "p=0 branch mismatch"

    print("KERNEL_OK")
</pallas_src>

<mosaic_0001>
module attributes {stable_mosaic.version = 11 : i64} {
  func.func @_transform_kernel(%arg0: i32, %arg1: memref<2x1024xf32, #tpu.memory_space<vmem>>, %arg2: memref<2x1024xf32, #tpu.memory_space<vmem>>) attributes {dimension_semantics = [#tpu.dimension_semantics<parallel>], iteration_bounds = array<i64: 1>, scalar_prefetch = 0 : i64, scratch_operands = 0 : i64, tpu.core_type = #tpu.core_type<tc>, window_params = [{transform_indices = @transform_0, window_bounds = array<i64: 2, 1024>}, {transform_indices = @transform_1, window_bounds = array<i64: 2, 1024>}]} {
    %c0 = arith.constant 0 : index
    %c0_0 = arith.constant 0 : index
    %0 = vector.load %arg1[%c0, %c0_0] : memref<2x1024xf32, #tpu.memory_space<vmem>>, vector<2x1024xf32>
    %cst = arith.constant 1.250000e+00 : f32
    %1 = vector.broadcast %cst : f32 to vector<2x1024xf32>
    %2 = arith.mulf %0, %1 : vector<2x1024xf32>
    %cst_1 = arith.constant 1.000000e-01 : f32
    %3 = vector.broadcast %cst_1 : f32 to vector<2x1024xf32>
    %4 = arith.addf %2, %3 : vector<2x1024xf32>
    %cst_2 = arith.constant 0.000000e+00 : f32
    %cst_3 = arith.constant 1.000000e+00 : f32
    %5 = vector.broadcast %cst_2 : f32 to vector<2x1024xf32>
    %6 = arith.maximumf %5, %4 : vector<2x1024xf32>
    %7 = vector.broadcast %cst_3 : f32 to vector<2x1024xf32>
    %8 = arith.minimumf %7, %6 : vector<2x1024xf32>
    %c0_4 = arith.constant 0 : index
    %c0_5 = arith.constant 0 : index
    %9 = vector.load %arg2[%c0_4, %c0_5] : memref<2x1024xf32, #tpu.memory_space<vmem>>, vector<2x1024xf32>
    tpu.vector_store %arg2[%c0_4, %c0_5], %8 {strides = array<i32>} : memref<2x1024xf32, #tpu.memory_space<vmem>>, vector<2x1024xf32>,
    return
  }
  func.func @transform_0(%arg0: i32) -> (i32, i32) {
    %c0_i32 = arith.constant 0 : i32
    %c0_i32_0 = arith.constant 0 : i32
    return %arg0, %c0_i32 : i32, i32
  }
  func.func @transform_1(%arg0: i32) -> (i32, i32) {
    %c0_i32 = arith.constant 0 : i32
    %c0_i32_0 = arith.constant 0 : i32
    return %arg0, %c0_i32 : i32, i32
  }
}

</mosaic_0001>

<llo_original>
// kernel: branch_1_fun.1
$region0: #{branch_1_fun.1}
  #allocation0 [shape = 'u32[]', space=smem, size = 0x4, offset = 0x4, fixed_abs, tag = 'smem constant byte address 0x4 - core index']
  #allocation1 [shape = 'u32[144,128]{1,0:T(1,128)}', space=vmem, size = 0x12000, scoped, tag = 'internal scratch']
  %s0 = inlined_call_operand.vmem [shape: f32[2,1024], index: 0, kind: input, shape index: {}, may-alias: {0,1}]
  %s1 = inlined_call_operand.vmem [shape: f32[2,1024], index: 1, kind: output, shape index: {}, may-alias: {0,1}]
  %s2 = sld [smem:[#allocation0]]
  $region14: #{branch_1_fun.1} parent=0
    _
  %s4 = ssub.s32 1, %s2
  %s5 = scalar_select 0, %s4, %s2
  // Predicated region
  $region2: #{branch_1_fun.1} parent=0 // pred_check
    _
  $region3: #{branch_1_fun.1} parent=0 // pred_check_branch
    %7 = sbr.rel (0) target = $region5
  $region4: #{branch_1_fun.1} parent=0 // pred_region
    _
  $region5: #{branch_1_fun.1} parent=0 // pred_fallthru
    _
  %v8 = vld [vmem:[%s0] sm:$0xff]
  %v9 = vld [vmem:[%s0 + $0x8] sm:$0xff]
  %v10 = vmul.f32 %v8, 1.25
  %v11 = vmul.f32 %v9, 1.25
  %v12 = vadd.f32 %v10, 0.1
  %v13 = vadd.f32 %v11, 0.1
  %v14 = vmax.f32 %v12, 0.0
  %v15 = vmax.f32 %v13, 0.0
  %v16 = vmin.f32 %v14, 1.0
  %v17 = vmin.f32 %v15, 1.0
  %18 = vst [vmem:[%s1] sm:$0xff] %v16
  %19 = vst [vmem:[%s1 + $0x8] sm:$0xff] %v17
  // Predicated region
  $region6: #{branch_1_fun.1} parent=0 // pred_check
    _
  $region7: #{branch_1_fun.1} parent=0 // pred_check_branch
    %21 = sbr.rel (0) target = $region9
  $region8: #{branch_1_fun.1} parent=0 // pred_region
    _
  $region9: #{branch_1_fun.1} parent=0 // pred_fallthru
    _
  // Predicated region
  $region10: #{branch_1_fun.1} parent=0 // pred_check
    _
  $region11: #{branch_1_fun.1} parent=0 // pred_check_branch
    %23 = sbr.rel (0) target = $region13
  $region12: #{branch_1_fun.1} parent=0 // pred_region
    _
  $region13: #{branch_1_fun.1} parent=0 // pred_fallthru
    _

</llo_original>
